<compile_context>
chip_gen: v7x
topology: tpu7x:2x2x1
jax: 0.10.0
libtpu: 0.0.40
codegen_flags: <defaults>
</compile_context>

<pallas_src>
import functools

import jax
import jax.numpy as jnp
from jax.experimental import pallas as pl
from jax.experimental.pallas import tpu as pltpu


def _layernorm_kernel(x_ref, a_ref, b_ref, o_ref, *, eps, features):
    # x_ref: (TILE_R, F) block; a_ref/b_ref: (1, F) params.
    x = x_ref[...].astype(jnp.float32)

    mean = jnp.mean(x, axis=-1, keepdims=True)            # (TILE_R, 1)
    diff = x - mean                                        # (TILE_R, F)
    # PyTorch tensor.std() is the unbiased estimator (divide by N-1).
    var = jnp.sum(diff * diff, axis=-1, keepdims=True) / jnp.float32(features - 1)
    std = jnp.sqrt(var)                                    # (TILE_R, 1)

    # Per-row reciprocal on the EUP (its own VLIW slot) + one Newton-Raphson
    # refinement on the (TILE_R, 1) column to recover full f32 accuracy.
    d = std + jnp.float32(eps)
    inv = pl.reciprocal(d, approx=True)
    inv = inv * (jnp.float32(2.0) - d * inv)

    a = a_ref[...].astype(jnp.float32)                     # (1, F)
    b = b_ref[...].astype(jnp.float32)                     # (1, F)
    y = (diff * inv) * a + b
    o_ref[...] = y.astype(o_ref.dtype)


def _pick_tile_rows(rows, features, itemsize, target_bytes=4 << 20, max_rows=4096):
    """Choose a row tile giving ~target_bytes per x block, multiple of 8."""
    bytes_per_row = max(1, features * itemsize)
    tr = target_bytes // bytes_per_row
    tr = int(max(8, min(tr, max_rows)))
    tr = (tr // 8) * 8
    if rows <= tr:
        # Single block spanning all rows (block dim == full array dim is legal
        # even when not a multiple of 8).
        return rows
    return tr


def layer_norm(x, a_2, b_2, eps=1e-6, tile_rows=None):
    """LayerNorm over the last axis of x, matching the PyTorch module."""
    orig_shape = x.shape
    features = orig_shape[-1]
    x2 = x.reshape(-1, features)
    rows = x2.shape[0]

    itemsize = jnp.dtype(x2.dtype).itemsize
    if tile_rows is None:
        tile_rows = _pick_tile_rows(rows, features, itemsize)

    a2 = a_2.reshape(1, features)
    b2 = b_2.reshape(1, features)

    # VMEM budget: double-buffered input + output tiles, f32 temps, params,
    # plus slack.  Clamped to stay well under v7x's 64 MiB physical VMEM.
    x_tile_bytes = tile_rows * features * itemsize
    f32_tile_bytes = tile_rows * features * 4
    needed = 2 * 2 * x_tile_bytes + 3 * f32_tile_bytes + 4 * features * 4 + (1 << 20)
    vmem_limit = int(min(max(needed, 32 << 20), 48 << 20))

    grid = (pl.cdiv(rows, tile_rows),)
    out = pl.pallas_call(
        functools.partial(_layernorm_kernel, eps=eps, features=features),
        out_shape=jax.ShapeDtypeStruct((rows, features), x.dtype),
        grid_spec=pltpu.PrefetchScalarGridSpec(
            num_scalar_prefetch=0,
            grid=grid,
            in_specs=[
                pl.BlockSpec((tile_rows, features), lambda i: (i, 0)),
                pl.BlockSpec((1, features), lambda i: (0, 0)),
                pl.BlockSpec((1, features), lambda i: (0, 0)),
            ],
            out_specs=pl.BlockSpec((tile_rows, features), lambda i: (i, 0)),
        ),
        compiler_params=pltpu.CompilerParams(
            dimension_semantics=("parallel",),
            vmem_limit_bytes=vmem_limit,
        ),
    )(x2, a2, b2)

    return out.reshape(orig_shape)


def layer_norm_ref(x, a_2, b_2, eps=1e-6):
    xf = x.astype(jnp.float32)
    mean = jnp.mean(xf, axis=-1, keepdims=True)
    diff = xf - mean
    n = x.shape[-1]
    var = jnp.sum(diff * diff, axis=-1, keepdims=True) / (n - 1)
    std = jnp.sqrt(var)
    return (a_2 * diff / (std + eps) + b_2).astype(x.dtype)


if __name__ == "__main__":
    key = jax.random.PRNGKey(0)
    batch, seq, hidden = 2, 8, 32

    x = jax.random.normal(key, (batch, seq, hidden), dtype=jnp.float32)

    # Deterministic parameter init, per the module's __init__.
    a_2 = jnp.ones((hidden,), dtype=jnp.float32)
    b_2 = jnp.zeros((hidden,), dtype=jnp.float32)

    out = layer_norm(x, a_2, b_2, eps=1e-6)
    out = jax.block_until_ready(out)

    ref = layer_norm_ref(x, a_2, b_2, eps=1e-6)
    assert out.shape == x.shape
    assert jnp.max(jnp.abs(out - ref)) < 1e-3, "mismatch vs reference"

    print("KERNEL_OK")
</pallas_src>

<mosaic_0001>
module attributes {stable_mosaic.version = 11 : i64} {
  func.func @_layernorm_kernel(%arg0: i32, %arg1: memref<16x32xf32, #tpu.memory_space<vmem>>, %arg2: memref<1x32xf32, #tpu.memory_space<vmem>>, %arg3: memref<1x32xf32, #tpu.memory_space<vmem>>, %arg4: memref<16x32xf32, #tpu.memory_space<vmem>>) attributes {dimension_semantics = [#tpu.dimension_semantics<parallel>], iteration_bounds = array<i64: 1>, scalar_prefetch = 0 : i64, scratch_operands = 0 : i64, tpu.core_type = #tpu.core_type<tc>, window_params = [{transform_indices = @transform_0, window_bounds = array<i64: 16, 32>}, {pipeline_mode = #tpu.pipeline_mode<synchronous>, transform_indices = @transform_1, window_bounds = array<i64: 1, 32>}, {pipeline_mode = #tpu.pipeline_mode<synchronous>, transform_indices = @transform_2, window_bounds = array<i64: 1, 32>}, {transform_indices = @transform_3, window_bounds = array<i64: 16, 32>}]} {
    %c0 = arith.constant 0 : index
    %c0_0 = arith.constant 0 : index
    %0 = vector.load %arg1[%c0, %c0_0] : memref<16x32xf32, #tpu.memory_space<vmem>>, vector<16x32xf32>
    %cst = arith.constant dense<0.000000e+00> : vector<16xf32>
    %1 = vector.multi_reduction <add>, %0, %cst [1] : vector<16x32xf32> to vector<16xf32>
    %2 = vector.shape_cast %1 : vector<16xf32> to vector<16x1xf32>
    %cst_1 = arith.constant 3.200000e+01 : f32
    %3 = vector.broadcast %cst_1 : f32 to vector<16x1xf32>
    %4 = arith.divf %2, %3 : vector<16x1xf32>
    %5 = vector.broadcast %4 : vector<16x1xf32> to vector<16x32xf32>
    %6 = arith.subf %0, %5 : vector<16x32xf32>
    %7 = arith.mulf %6, %6 : vector<16x32xf32>
    %cst_2 = arith.constant dense<0.000000e+00> : vector<16xf32>
    %8 = vector.multi_reduction <add>, %7, %cst_2 [1] : vector<16x32xf32> to vector<16xf32>
    %9 = vector.shape_cast %8 : vector<16xf32> to vector<16x1xf32>
    %cst_3 = arith.constant 3.100000e+01 : f32
    %10 = vector.broadcast %cst_3 : f32 to vector<16x1xf32>
    %11 = arith.divf %9, %10 : vector<16x1xf32>
    %12 = math.sqrt %11 : vector<16x1xf32>
    %cst_4 = arith.constant 9.99999997E-7 : f32
    %13 = vector.broadcast %cst_4 : f32 to vector<16x1xf32>
    %14 = arith.addf %12, %13 : vector<16x1xf32>
    %15 = tpu.reciprocal %14 {approx = true} : vector<16x1xf32> -> vector<16x1xf32>
    %16 = arith.mulf %14, %15 : vector<16x1xf32>
    %cst_5 = arith.constant 2.000000e+00 : f32
    %17 = vector.broadcast %cst_5 : f32 to vector<16x1xf32>
    %18 = arith.subf %17, %16 : vector<16x1xf32>
    %19 = arith.mulf %15, %18 : vector<16x1xf32>
    %c0_6 = arith.constant 0 : index
    %c0_7 = arith.constant 0 : index
    %20 = vector.load %arg2[%c0_6, %c0_7] : memref<1x32xf32, #tpu.memory_space<vmem>>, vector<1x32xf32>
    %c0_8 = arith.constant 0 : index
    %c0_9 = arith.constant 0 : index
    %21 = vector.load %arg3[%c0_8, %c0_9] : memref<1x32xf32, #tpu.memory_space<vmem>>, vector<1x32xf32>
    %22 = vector.broadcast %19 : vector<16x1xf32> to vector<16x32xf32>
    %23 = arith.mulf %6, %22 : vector<16x32xf32>
    %24 = vector.broadcast %20 : vector<1x32xf32> to vector<16x32xf32>
    %25 = arith.mulf %23, %24 : vector<16x32xf32>
    %26 = vector.broadcast %21 : vector<1x32xf32> to vector<16x32xf32>
    %27 = arith.addf %25, %26 : vector<16x32xf32>
    %c0_10 = arith.constant 0 : index
    %c0_11 = arith.constant 0 : index
    %28 = vector.load %arg4[%c0_10, %c0_11] : memref<16x32xf32, #tpu.memory_space<vmem>>, vector<16x32xf32>
    tpu.vector_store %arg4[%c0_10, %c0_11], %27 {strides = array<i32>} : memref<16x32xf32, #tpu.memory_space<vmem>>, vector<16x32xf32>,
    return
  }
  func.func @transform_0(%arg0: i32) -> (i32, i32) {
    %c0_i32 = arith.constant 0 : i32
    %c0_i32_0 = arith.constant 0 : i32
    return %arg0, %c0_i32 : i32, i32
  }
  func.func @transform_1(%arg0: i32) -> (i32, i32) {
    %c0_i32 = arith.constant 0 : i32
    %c0_i32_0 = arith.constant 0 : i32
    %c0_i32_1 = arith.constant 0 : i32
    return %c0_i32, %c0_i32_0 : i32, i32
  }
  func.func @transform_2(%arg0: i32) -> (i32, i32) {
    %c0_i32 = arith.constant 0 : i32
    %c0_i32_0 = arith.constant 0 : i32
    %c0_i32_1 = arith.constant 0 : i32
    return %c0_i32, %c0_i32_0 : i32, i32
  }
  func.func @transform_3(%arg0: i32) -> (i32, i32) {
    %c0_i32 = arith.constant 0 : i32
    %c0_i32_0 = arith.constant 0 : i32
    return %arg0, %c0_i32 : i32, i32
  }
}

</mosaic_0001>

<llo_original>
// kernel: tpu_custom_call.1
$region0: #{tpu_custom_call.1}
  #allocation0 [shape = 'u32[]', space=smem, size = 0x4, offset = 0x4, fixed_abs, tag = 'smem constant byte address 0x4 - core index']
  #allocation1 [shape = 'u32[144,128]{1,0:T(1,128)}', space=vmem, size = 0x12000, scoped, tag = 'internal scratch']
  %s0 = inlined_call_operand.hbm [shape: f32[16,32], index: 0, kind: input, shape index: {}]
  %s1 = inlined_call_operand.vmem [shape: f32[1,32], index: 1, kind: input, shape index: {}]
  %s2 = inlined_call_operand.vmem [shape: f32[1,32], index: 2, kind: input, shape index: {}]
  %s3 = inlined_call_operand.hbm [shape: f32[16,32], index: 3, kind: output, shape index: {}]
  %s4 = sld [smem:[#allocation0]]
  $region26: #{tpu_custom_call.1} parent=0
    _
  %s6 = ssub.s32 1, %s4
  %s7 = scalar_select 0, %s6, %s4
  $region1: #{tpu_custom_call.1} parent=0
    #allocation2 [shape = 'u8[8192]{0}', space=vmem, size = 0x2000, scoped, tag = 'input window, operand 0, single buffered']
    #allocation3 [shape = 's32[1]{0}', space=sflag, size = 0x4, scoped, tag = 'scoped memory for tpu_custom_call.1']
    #allocation4 [shape = 's32[1]{0}', space=sflag, size = 0x4, scoped, tag = 'scoped memory for tpu_custom_call.1']
    #allocation5 [shape = 'u8[8192]{0}', space=vmem, size = 0x2000, scoped, tag = 'output window, operand 0, single buffered']
    %8 = vsyncpa [#allocation3], 0
    %9 = vsyncpa [#allocation4], 0
    // Predicated region
    $region2: #{tpu_custom_call.1} parent=1 // pred_check
      _
    $region3: #{tpu_custom_call.1} parent=1 // pred_check_branch
      %11 = sbr.rel (0) target = $region5
    $region4: #{tpu_custom_call.1} parent=1 // pred_region
      %s13 = ssub.s32 256, 256
      %14 = vsyncadd [#allocation3], %s13
      %s15 = sshll.u32 [#allocation2], 4
      %s16 = int_to_ptr.vmem [resolvable:$true] %s15
      %21 = dma.hbm_to_vmem [thread:$0]  %s0, 256, %s16, [#allocation3], 128, 128, 8
    $region5: #{tpu_custom_call.1} parent=1 // pred_fallthru
      _
    // Predicated region
    $region6: #{tpu_custom_call.1} parent=1 // pred_check
      _
    $region7: #{tpu_custom_call.1} parent=1 // pred_check_branch
      %23 = sbr.rel (0) target = $region9
    $region8: #{tpu_custom_call.1} parent=1 // pred_region
      _
    $region9: #{tpu_custom_call.1} parent=1 // pred_fallthru
      _
    // Predicated region
    $region10: #{tpu_custom_call.1} parent=1 // pred_check
      _
    $region11: #{tpu_custom_call.1} parent=1 // pred_check_branch
      %25 = sbr.rel (0) target = $region13
    $region12: #{tpu_custom_call.1} parent=1 // pred_region
      _
    $region13: #{tpu_custom_call.1} parent=1 // pred_fallthru
      _
    // Predicated region
    $region14: #{tpu_custom_call.1} parent=1 // pred_check
      _
    $region15: #{tpu_custom_call.1} parent=1 // pred_check_branch
      %27 = sbr.rel (0) target = $region17
    $region16: #{tpu_custom_call.1} parent=1 // pred_region
      %28 = dma.done [#allocation3], 256
    $region17: #{tpu_custom_call.1} parent=1 // pred_fallthru
      _
    %v29 = vld [vmem:[#allocation2] sm:$0xff]
    %v30 = vld [vmem:[#allocation2 + $0x8] sm:$0xff]
    %vm31 = vcmask 261120
    %v32 = vsel %vm31, %v29, 0.0
    %33 = vadd.xlane.f32.xlu0 %v32
    %v34 = vpop.xlane.xlu0 %33
    %v35 = vsel %vm31, %v30, 0.0
    %36 = vadd.xlane.f32.xlu0 %v35
    %v37 = vpop.xlane.xlu0 %36
    %v38 = vrcp.pop 32.0
    %v39 = vmul.f32 %v34, %v38
    %v40 = vmul.f32 %v37, %v38
    %v41 = vsub.f32 %v29, %v39
    %v42 = vsub.f32 %v30, %v40
    %v43 = vmul.f32 %v41, %v41
    %v44 = vmul.f32 %v42, %v42
    %v45 = vsel %vm31, %v43, 0.0
    %46 = vadd.xlane.f32.xlu0 %v45
    %v47 = vpop.xlane.xlu0 %46
    %v48 = vsel %vm31, %v44, 0.0
    %49 = vadd.xlane.f32.xlu0 %v48
    %v50 = vpop.xlane.xlu0 %49
    %v51 = vrcp.pop 31.0
    %v52 = vmul.f32 %v47, %v51
    %v53 = vmul.f32 %v50, %v51
    %v54 = vrsqrt.pop %v52
    %v55 = vmul.f32 %v52, %v54
    %vm56 = vcmp.eq.f32.partialorder %v52, inf
    %v57 = vsel %vm56, %v52, %v55
    %vm58 = vcmp.eq.f32.partialorder %v52, 0.0
    %v59 = vand.u32 %v52, 2147483648
    %v60 = vsel %vm58, %v59, %v57
    %v61 = vrsqrt.pop %v53
    %v62 = vmul.f32 %v53, %v61
    %vm63 = vcmp.eq.f32.partialorder %v53, inf
    %v64 = vsel %vm63, %v53, %v62
    %vm65 = vcmp.eq.f32.partialorder %v53, 0.0
    %v66 = vand.u32 %v53, 2147483648
    %v67 = vsel %vm65, %v66, %v64
    %v68 = vadd.f32 %v60, 1e-06
    %v69 = vadd.f32 %v67, 1e-06
    %v70 = vrcp.pop %v68
    %v71 = vrcp.pop %v69
    %v72 = vmul.f32 %v68, %v70
    %v73 = vmul.f32 %v69, %v71
    %v74 = vsub.f32 2.0, %v72
    %v75 = vsub.f32 2.0, %v73
    %v76 = vmul.f32 %v70, %v74
    %v77 = vmul.f32 %v71, %v75
    %v78 = vld [vmem:[%s1] sm:$0x1]
    %v79 = vld [vmem:[%s2] sm:$0x1]
    %v80 = vmul.f32 %v41, %v76
    %v81 = vmul.f32 %v42, %v77
    %v83 = vlaneseq
    %v84 = vshrl.u32 %v83, 7
    %v85 = vsub.s32 0, %v84
    %v86 = vrot.slane %v78, %v85
    %v88 = vmul.f32 %v80, %v86
    %v89 = vmul.f32 %v81, %v86
    %v91 = vlaneseq
    %v92 = vshrl.u32 %v91, 7
    %v93 = vsub.s32 0, %v92
    %v94 = vrot.slane %v79, %v93
    %v96 = vadd.f32 %v88, %v94
    %v97 = vadd.f32 %v89, %v94
    %98 = vst.msk [vmem:[#allocation5] sm:$0xff] %vm31, %v96
    %99 = vst.msk [vmem:[#allocation5 + $0x8] sm:$0xff] %vm31, %v97
    // Predicated region
    $region18: #{tpu_custom_call.1} parent=1 // pred_check
      _
    $region19: #{tpu_custom_call.1} parent=1 // pred_check_branch
      %101 = sbr.rel (0) target = $region21
    $region20: #{tpu_custom_call.1} parent=1 // pred_region
      %s103 = ssub.s32 256, 256
      %104 = vsyncadd [#allocation4], %s103
      %s105 = sshll.u32 [#allocation5], 4
      %s106 = int_to_ptr.vmem [resolvable:$true] %s105
      %111 = dma.vmem_to_hbm [thread:$0]  %s106, 256, %s3, [#allocation4], 128, 128, 8
    $region21: #{tpu_custom_call.1} parent=1 // pred_fallthru
      _
    // Predicated region
    $region22: #{tpu_custom_call.1} parent=1 // pred_check
      _
    $region23: #{tpu_custom_call.1} parent=1 // pred_check_branch
      %113 = sbr.rel (0) target = $region25
    $region24: #{tpu_custom_call.1} parent=1 // pred_region
      %114 = dma.done [#allocation4], 256
    $region25: #{tpu_custom_call.1} parent=1 // pred_fallthru
      _
    %115 = vsyncpa [#allocation3], 1
    %116 = vsyncpa [#allocation4], 1

</llo_original>
